<compile_context>
chip_gen: v5e
topology: v5e:2x2
jax: 0.10.0
libtpu: 0.0.40
codegen_flags: <defaults>
</compile_context>

<pallas_src>
import functools
import numpy as np

import jax
import jax.numpy as jnp
from jax.experimental import pallas as pl
from jax.experimental.pallas import tpu as pltpu


_VMEM_LIMIT = 48 * 1024 * 1024   # safe on v7x (64 MiB/TC physical), > default scoped limit elsewhere


# ---------------------------------------------------------------------------
# helpers
# ---------------------------------------------------------------------------
def _round_up(a, m):
    return (a + m - 1) // m * m


def _pick_div_tile(dim, align, candidates):
    """Largest candidate tile that divides round_up(dim, align) -> (tile, padded_dim)."""
    dp = _round_up(max(dim, 1), align)
    for c in candidates:
        if dp % c == 0:
            return c, dp
    return dp, dp


# ---------------------------------------------------------------------------
# Pallas kernels: matmul (+ fused bias / GELU epilogue)
# ---------------------------------------------------------------------------
def _matmul_kernel(x_ref, w_ref, b_ref, o_ref, acc_ref, *, activation):
    k = pl.program_id(2)

    @pl.when(k == 0)
    def _():
        acc_ref[...] = jnp.zeros_like(acc_ref)

    # bf16 MXU path, f32 accumulation (x tiles already bf16 on all hot paths).
    acc_ref[...] += jnp.dot(x_ref[...].astype(jnp.bfloat16),
                            w_ref[...].astype(jnp.bfloat16),
                            preferred_element_type=jnp.float32)

    @pl.when(k == pl.num_programs(2) - 1)
    def _():
        y = acc_ref[...] + b_ref[...].astype(jnp.float32)
        if activation == "gelu_tanh":
            # fused GELU epilogue (tanh approx; see TODO at top of file)
            y = 0.5 * y * (1.0 + jnp.tanh(0.7978845608028654 * (y + 0.044715 * y * y * y)))
        o_ref[...] = y.astype(o_ref.dtype)


def linear_pallas(x, w, b=None, out_dtype=None, activation=None):
    """y = act(x @ w + b) over the last dim of x.  w: (K, N) bf16 storage, b: (N,) or None."""
    orig_shape = x.shape
    K = orig_shape[-1]
    N = w.shape[1]
    out_dtype = out_dtype or x.dtype
    x2 = x.reshape(-1, K)
    M = x2.shape[0]

    tm = min(512, _round_up(M, 8))
    Mp = _round_up(M, tm)
    tk, Kp = _pick_div_tile(K, 128, (512, 384, 256, 128))
    tn, Np = _pick_div_tile(N, 128, (512, 384, 256, 128))

    xp = x2 if (Mp == M and Kp == K) else jnp.pad(x2, ((0, Mp - M), (0, Kp - K)))
    wp = w if (Kp == K and Np == N) else jnp.pad(w, ((0, Kp - K), (0, Np - N)))
    if b is None:
        b = jnp.zeros((N,), jnp.float32)
    bvec = b.astype(jnp.float32)
    bp = (bvec if Np == N else jnp.pad(bvec, (0, Np - N))).reshape(1, Np)

    out = pl.pallas_call(
        functools.partial(_matmul_kernel, activation=activation),
        out_shape=jax.ShapeDtypeStruct((Mp, Np), out_dtype),
        grid=(Mp // tm, Np // tn, Kp // tk),
        in_specs=[
            pl.BlockSpec((tm, tk), lambda i, j, k: (i, k)),
            pl.BlockSpec((tk, tn), lambda i, j, k: (k, j)),
            pl.BlockSpec((1, tn), lambda i, j, k: (0, j)),
        ],
        out_specs=pl.BlockSpec((tm, tn), lambda i, j, k: (i, j)),
        scratch_shapes=[pltpu.VMEM((tm, tn), jnp.float32)],
        compiler_params=pltpu.CompilerParams(
            dimension_semantics=("parallel", "parallel", "arbitrary"),
            vmem_limit_bytes=_VMEM_LIMIT),
    )(xp, wp, bp)
    if Mp != M or Np != N:
        out = out[:M, :N]
    return out.reshape(orig_shape[:-1] + (N,))


# ---------------------------------------------------------------------------
# Pallas kernels: LayerNorm (with out_dtype so matmul consumers get bf16 tiles)
# ---------------------------------------------------------------------------
def _layernorm_kernel(x_ref, g_ref, b_ref, o_ref, *, eps):
    x = x_ref[...].astype(jnp.float32)
    mu = jnp.mean(x, axis=-1, keepdims=True)
    xc = x - mu
    var = jnp.mean(xc * xc, axis=-1, keepdims=True)
    y = xc * jax.lax.rsqrt(var + eps)
    o_ref[...] = (y * g_ref[...].astype(jnp.float32)
                  + b_ref[...].astype(jnp.float32)).astype(o_ref.dtype)


def layernorm_pallas(x, gamma, beta, eps=1e-5, out_dtype=None):
    orig_shape = x.shape
    C = orig_shape[-1]
    assert C % 128 == 0, "all LayerNorm widths in this model are multiples of 128"
    out_dtype = out_dtype or x.dtype
    x2 = x.reshape(-1, C)
    M = x2.shape[0]
    tm = min(512, _round_up(M, 8))
    Mp = _round_up(M, tm)
    xp = x2 if Mp == M else jnp.pad(x2, ((0, Mp - M), (0, 0)))

    out = pl.pallas_call(
        functools.partial(_layernorm_kernel, eps=eps),
        out_shape=jax.ShapeDtypeStruct((Mp, C), out_dtype),
        grid=(Mp // tm,),
        in_specs=[
            pl.BlockSpec((tm, C), lambda i: (i, 0)),
            pl.BlockSpec((1, C), lambda i: (0, 0)),
            pl.BlockSpec((1, C), lambda i: (0, 0)),
        ],
        out_specs=pl.BlockSpec((tm, C), lambda i: (i, 0)),
        compiler_params=pltpu.CompilerParams(
            dimension_semantics=("parallel",),
            vmem_limit_bytes=_VMEM_LIMIT),
    )(xp, gamma.reshape(1, C), beta.reshape(1, C))
    if Mp != M:
        out = out[:M]
    return out.reshape(orig_shape)


# ---------------------------------------------------------------------------
# Pallas kernels: shifted-window attention (head-grouped, qkv-layout native)
# ---------------------------------------------------------------------------
def _attn_kernel(q_ref, k_ref, v_ref, b_ref, *rest, scale, heads, head_dim, has_mask,
                 n_valid, n_pad):
    if has_mask:
        lr_ref, lc_ref, o_ref = rest
    else:
        (o_ref,) = rest

    q_all = q_ref[0] * scale        # (Np, G*d) bf16 — softmax scale folded into q once
    k_all = k_ref[0]
    v_all = v_ref[0]

    extra = None
    if has_mask:
        # shifted-window region mask rebuilt from per-window labels (torchvision -100 semantics)
        extra = jnp.where(lr_ref[0] != lc_ref[0], -100.0, 0.0).astype(jnp.float32)   # (Np, Np)
    if n_pad > n_valid:
        # alignment-padding keys (tokens that don't exist in the reference) -> fully masked
        col = jax.lax.broadcasted_iota(jnp.int32, (1, n_pad), 1)
        pad_mask = jnp.where(col >= n_valid, -1e30, 0.0).astype(jnp.float32)         # (1, Np)
        extra = pad_mask if extra is None else extra + pad_mask

    outs = []
    for h in range(heads):
        sl = slice(h * head_dim, (h + 1) * head_dim)
        s = jax.lax.dot_general(q_all[:, sl], k_all[:, sl], (((1,), (1,)), ((), ())),
                                preferred_element_type=jnp.float32)                  # (Np, Np)
        s = s + b_ref[h].astype(jnp.float32)
        if extra is not None:
            s = s + extra
        s = s - jnp.max(s, axis=-1, keepdims=True)
        p = jnp.exp(s)
        p = p * pl.reciprocal(jnp.sum(p, axis=-1, keepdims=True), approx=True)
        outs.append(jnp.dot(p.astype(v_all.dtype), v_all[:, sl],
                            preferred_element_type=jnp.float32))                     # (Np, d)
    o_ref[0] = jnp.concatenate(outs, axis=-1).astype(o_ref.dtype)                    # (Np, G*d)


def window_attention_pallas(qkv, rel_bias, labels, scale, num_heads):
    """qkv: (B*nW, N, 3C) bf16;  rel_bias: (nH, N, N) bf16;  labels: numpy (nW, N) f32 or None."""
    BW, N, C3 = qkv.shape
    C = C3 // 3
    d = C // num_heads
    assert 128 % d == 0 and C % 128 == 0
    G = min(num_heads, 128 // d)        # heads per grid step: G*d == 128-lane dense blocks
    assert num_heads % G == 0
    nG = num_heads // G
    Gd = G * d

    Np = _round_up(N, 8)
    pad_n = Np - N
    if pad_n:
        qkv = jnp.pad(qkv, ((0, 0), (0, pad_n), (0, 0)))
        rel_bias = jnp.pad(rel_bias, ((0, 0), (0, pad_n), (0, pad_n)))
        if labels is not None:
            labels = np.pad(labels, ((0, 0), (0, pad_n)), constant_values=-1.0)

    has_mask = labels is not None
    # q / k / v are column slabs of the same qkv buffer: block-column offsets 0 / nG / 2*nG.
    in_specs = [
        pl.BlockSpec((1, Np, Gd), lambda g, i: (i, 0, g)),
        pl.BlockSpec((1, Np, Gd), lambda g, i: (i, 0, nG + g)),
        pl.BlockSpec((1, Np, Gd), lambda g, i: (i, 0, 2 * nG + g)),
        pl.BlockSpec((G, Np, Np), lambda g, i: (g, 0, 0)),
    ]
    operands = [qkv, qkv, qkv, rel_bias]
    if has_mask:
        nM = labels.shape[0]
        lab_row = jnp.asarray(labels.reshape(nM, Np, 1), dtype=jnp.float32)
        lab_col = jnp.asarray(labels.reshape(nM, 1, Np), dtype=jnp.float32)
        in_specs += [
            pl.BlockSpec((1, Np, 1), lambda g, i: (i % nM, 0, 0)),
            pl.BlockSpec((1, 1, Np), lambda g, i: (i % nM, 0, 0)),
        ]
        operands += [lab_row, lab_col]

    out = pl.pallas_call(
        functools.partial(_attn_kernel, scale=scale, heads=G, head_dim=d,
                          has_mask=has_mask, n_valid=N, n_pad=Np),
        out_shape=jax.ShapeDtypeStruct((BW, Np, C), qkv.dtype),
        grid=(nG, BW),                    # head-group outer => bias slab DMA'd once per group
        in_specs=in_specs,
        out_specs=pl.BlockSpec((1, Np, Gd), lambda g, i: (i, 0, g)),
        compiler_params=pltpu.CompilerParams(
            dimension_semantics=("parallel", "parallel"),
            vmem_limit_bytes=_VMEM_LIMIT),
    )(*operands)
    if pad_n:
        out = out[:, :N, :]
    return out


# ---------------------------------------------------------------------------
# Swin-3D glue (window partition / rel-pos bias / merging) — plain JAX / numpy
# ---------------------------------------------------------------------------
CFG = dict(
    patch_size=(2, 4, 4),
    embed_dim=128,
    depths=(2, 2, 18, 2),
    num_heads=(4, 8, 16, 32),
    window_size=(8, 7, 7),
    mlp_ratio=4.0,
    in_channels=4,
)


def compute_rel_position_index(window_size):
    ws = window_size
    coords = np.stack(np.meshgrid(np.arange(ws[0]), np.arange(ws[1]), np.arange(ws[2]),
                                  indexing="ij"))                        # (3, Wd, Wh, Ww)
    flat = coords.reshape(3, -1)
    rel = flat[:, :, None] - flat[:, None, :]                            # (3, N, N)
    rel = rel.transpose(1, 2, 0).astype(np.int64)
    rel[:, :, 0] += ws[0] - 1
    rel[:, :, 1] += ws[1] - 1
    rel[:, :, 2] += ws[2] - 1
    rel[:, :, 0] *= (2 * ws[1] - 1) * (2 * ws[2] - 1)
    rel[:, :, 1] *= 2 * ws[2] - 1
    return rel.sum(-1)                                                   # (N, N)


def _compute_window_region_labels(padded_size, window_size, shift_size):
    """Per-window region labels (nW, N) float32; mask = -100 where labels differ (torchvision)."""
    Tp, Hp, Wp = padded_size
    lbl = np.zeros((Tp, Hp, Wp), dtype=np.float32)
    slices = [((0, -window_size[i]), (-window_size[i], -shift_size[i]), (-shift_size[i], None))
              for i in range(3)]
    count = 0
    for ts in slices[0]:
        for hs in slices[1]:
            for ws_ in slices[2]:
                lbl[ts[0]:ts[1], hs[0]:hs[1], ws_[0]:ws_[1]] = count
                count += 1
    m = lbl.reshape(Tp // window_size[0], window_size[0],
                    Hp // window_size[1], window_size[1],
                    Wp // window_size[2], window_size[2])
    m = m.transpose(0, 2, 4, 1, 3, 5).reshape(-1, window_size[0] * window_size[1] * window_size[2])
    return m.astype(np.float32)                                          # (nW, N)


def _shifted_window_attention_3d(x, bp, num_heads, window_size_cfg, shift_size_cfg, rel_index_full):
    B, T, H, W, C = x.shape
    size_dhw = (T, H, W)
    window_size = list(window_size_cfg)
    shift_size = list(shift_size_cfg)
    for i in range(3):
        if size_dhw[i] <= window_size[i]:
            window_size[i] = size_dhw[i]
            shift_size[i] = 0
    ws = window_size
    N = ws[0] * ws[1] * ws[2]
    d = C // num_heads

    # relative position bias (torchvision slices the full-window index table) -> (nH, N, N) bf16
    idx = np.asarray(rel_index_full[:N, :N]).reshape(-1)
    bias = bp['rel_table'][jnp.asarray(idx)].reshape(N, N, num_heads)
    bias = jnp.transpose(bias, (2, 0, 1)).astype(jnp.bfloat16)

    pad_t = (ws[0] - T % ws[0]) % ws[0]
    pad_h = (ws[1] - H % ws[1]) % ws[1]
    pad_w = (ws[2] - W % ws[2]) % ws[2]
    xp = jnp.pad(x, ((0, 0), (0, pad_t), (0, pad_h), (0, pad_w), (0, 0)))
    Tp, Hp, Wp = T + pad_t, H + pad_h, W + pad_w

    if sum(shift_size) > 0:
        xp = jnp.roll(xp, shift=(-shift_size[0], -shift_size[1], -shift_size[2]), axis=(1, 2, 3))

    nW = (Tp // ws[0]) * (Hp // ws[1]) * (Wp // ws[2])
    xw = xp.reshape(B, Tp // ws[0], ws[0], Hp // ws[1], ws[1], Wp // ws[2], ws[2], C)
    xw = xw.transpose(0, 1, 3, 5, 2, 4, 6, 7).reshape(B * nW, N, C)

    # qkv stays in (B*nW, N, 3C) layout — the attention kernel slices per-head-group q/k/v column
    # blocks via its BlockSpec index_maps and writes (B*nW, N, C) directly (no XLA transposes).
    qkv = linear_pallas(xw, bp['qkv_w'], bp['qkv_b'], out_dtype=jnp.bfloat16)

    if sum(shift_size) > 0:
        labels = _compute_window_region_labels((Tp, Hp, Wp), tuple(ws), tuple(shift_size))  # (nW, N)
    else:
        labels = None

    scale = float(d) ** -0.5
    attn_out = window_attention_pallas(qkv, bias, labels, scale, num_heads)     # (B*nW, N, C) bf16

    out = linear_pallas(attn_out, bp['proj_w'], bp['proj_b'], out_dtype=jnp.float32)

    out = out.reshape(B, Tp // ws[0], Hp // ws[1], Wp // ws[2], ws[0], ws[1], ws[2], C)
    out = out.transpose(0, 1, 4, 2, 5, 3, 6, 7).reshape(B, Tp, Hp, Wp, C)
    if sum(shift_size) > 0:
        out = jnp.roll(out, shift=tuple(shift_size), axis=(1, 2, 3))
    return out[:, :T, :H, :W, :]


def _swin_block(bp, x, num_heads, window_size_cfg, shift_size_cfg, rel_index_full):
    # TODO(synk): StochasticDepth(p>0) / dropout are training-time ops; inference = identity.
    h = layernorm_pallas(x, bp['norm1_g'], bp['norm1_b'], out_dtype=jnp.bfloat16)
    h = _shifted_window_attention_3d(h, bp, num_heads, window_size_cfg, shift_size_cfg, rel_index_full)
    x = x + h
    h2 = layernorm_pallas(x, bp['norm2_g'], bp['norm2_b'], out_dtype=jnp.bfloat16)
    h2 = linear_pallas(h2, bp['fc1_w'], bp['fc1_b'], out_dtype=jnp.bfloat16,
                       activation="gelu_tanh")            # fused GELU epilogue, bf16 hidden
    h2 = linear_pallas(h2, bp['fc2_w'], bp['fc2_b'], out_dtype=jnp.float32)
    return x + h2


def _patch_merging(mp, x):
    B, T, H, W, C = x.shape
    x = jnp.pad(x, ((0, 0), (0, 0), (0, H % 2), (0, W % 2), (0, 0)))
    x0 = x[:, :, 0::2, 0::2, :]
    x1 = x[:, :, 1::2, 0::2, :]
    x2 = x[:, :, 0::2, 1::2, :]
    x3 = x[:, :, 1::2, 1::2, :]
    x = jnp.concatenate([x0, x1, x2, x3], axis=-1)                        # (B, T, H2, W2, 4C)
    shp = x.shape
    x = layernorm_pallas(x, mp['norm_g'], mp['norm_b'], out_dtype=jnp.bfloat16)
    x = linear_pallas(x, mp['red_w'], None, out_dtype=jnp.float32)
    return x.reshape(shp[:-1] + (2 * C,))


def swin3d_forward(p, x, cfg, rel_index_full):
    # x: (B, 4, T, H, W)   (PyTorch NCDHW)
    B, Cin, T, H, W = x.shape
    pt, ph, pw = cfg['patch_size']
    pad_t, pad_h, pad_w = (pt - T % pt) % pt, (ph - H % ph) % ph, (pw - W % pw) % pw
    x = jnp.pad(x, ((0, 0), (0, 0), (0, pad_t), (0, pad_h), (0, pad_w)))
    T2, H2, W2 = T + pad_t, H + pad_h, W + pad_w
    Tp, Hp, Wp = T2 // pt, H2 // ph, W2 // pw

    # PatchEmbed3d: conv3d(kernel=stride=patch) == patch-flatten + matmul (Pallas)
    patches = x.reshape(B, Cin, Tp, pt, Hp, ph, Wp, pw)
    patches = patches.transpose(0, 2, 4, 6, 1, 3, 5, 7).reshape(B * Tp * Hp * Wp,
                                                                Cin * pt * ph * pw)
    feat = linear_pallas(patches, p['patch_w'], p['patch_b'])
    feat = layernorm_pallas(feat, p['patch_norm_g'], p['patch_norm_b'])
    x = feat.reshape(B, Tp, Hp, Wp, cfg['embed_dim'])

    for i_stage, st in enumerate(p['stages']):
        nH = cfg['num_heads'][i_stage]
        for i_layer, blk in enumerate(st['blocks']):
            shift = tuple(0 if i_layer % 2 == 0 else w // 2 for w in cfg['window_size'])
            x = _swin_block(blk, x, nH, cfg['window_size'], shift, rel_index_full)
        if 'merge' in st:
            x = _patch_merging(st['merge'], x)

    x = layernorm_pallas(x, p['norm_g'], p['norm_b'])
    x = jnp.mean(x, axis=(1, 2, 3))                                       # AdaptiveAvgPool3d(1)
    return linear_pallas(x, p['head_w'], p['head_b'])


def bridged_video_swin_forward(params, inputs, cfg, rel_index_full, image_size, output_dim):
    eeg = inputs['eeg']
    video = inputs['video']
    # bridge MLP: flatten(-2) -> fc1 -> GELU -> fc2    (kept exact erf-GELU; tiny tensor)
    eeg = eeg.reshape(eeg.shape[:-2] + (-1,))
    h = linear_pallas(eeg, params['bridge']['fc1_w'], params['bridge']['fc1_b'])
    h = jax.nn.gelu(h, approximate=False)
    h = linear_pallas(h, params['bridge']['fc2_w'], params['bridge']['fc2_b'])
    eeg_img = h.reshape(h.shape[:2] + (1, image_size, image_size))
    four = jnp.concatenate([video, eeg_img], axis=-3)                     # (B, T, 4, H, W)
    four = jnp.swapaxes(four, -3, -4)                                     # (B, 4, T, H, W)
    out = swin3d_forward(params['swin'], four, cfg, rel_index_full)
    out_dim_tuple = (output_dim[0],) if output_dim[1] == 1 else tuple(output_dim)
    return out.reshape(out.shape[:-1] + out_dim_tuple)


# ---------------------------------------------------------------------------
# deterministic parameter init (synthetic — shapes match the PyTorch module)
# ---------------------------------------------------------------------------
class _KeyGen:
    def __init__(self, seed):
        self.key = jax.random.PRNGKey(seed)

    def __call__(self):
        self.key, sub = jax.random.split(self.key)
        return sub


def build_params(seed, *, image_size, eeg_channels, frequency_bins, output_dim, cfg):
    kg = _KeyGen(seed)

    def w_init(shape, dtype=jnp.bfloat16):
        # matmul weights stored bf16 (MXU-native, halves weight HBM traffic); f32 accumulation in-kernel
        return (0.02 * jax.random.normal(kg(), shape, jnp.float32)).astype(dtype)

    def zeros(shape):
        return jnp.zeros(shape, jnp.float32)

    def ones(shape):
        return jnp.ones(shape, jnp.float32)

    in_f = eeg_channels * frequency_bins
    out_f = image_size ** 2
    hid_f = out_f // 2
    params = dict(bridge=dict(fc1_w=w_init((in_f, hid_f)), fc1_b=zeros((hid_f,)),
                              fc2_w=w_init((hid_f, out_f)), fc2_b=zeros((out_f,))))

    pt, ph, pw = cfg['patch_size']
    embed = cfg['embed_dim']
    pk = cfg['in_channels'] * pt * ph * pw
    swin = dict(patch_w=w_init((pk, embed)), patch_b=zeros((embed,)),
                patch_norm_g=ones((embed,)), patch_norm_b=zeros((embed,)))

    ws = cfg['window_size']
    table_size = (2 * ws[0] - 1) * (2 * ws[1] - 1) * (2 * ws[2] - 1)
    stages = []
    for i, depth in enumerate(cfg['depths']):
        dim = embed * (2 ** i)
        nH = cfg['num_heads'][i]
        hidden = int(dim * cfg['mlp_ratio'])
        blocks = []
        for _ in range(depth):
            blocks.append(dict(
                norm1_g=ones((dim,)), norm1_b=zeros((dim,)),
                qkv_w=w_init((dim, 3 * dim)), qkv_b=zeros((3 * dim,)),
                proj_w=w_init((dim, dim)), proj_b=zeros((dim,)),
                rel_table=w_init((table_size, nH), jnp.float32),
                norm2_g=ones((dim,)), norm2_b=zeros((dim,)),
                fc1_w=w_init((dim, hidden)), fc1_b=zeros((hidden,)),
                fc2_w=w_init((hidden, dim)), fc2_b=zeros((dim,))))
        st = dict(blocks=blocks)
        if i < len(cfg['depths']) - 1:
            st['merge'] = dict(norm_g=ones((4 * dim,)), norm_b=zeros((4 * dim,)),
                               red_w=w_init((4 * dim, 2 * dim)))
        stages.append(st)
    swin['stages'] = stages

    num_features = embed * (2 ** (len(cfg['depths']) - 1))
    num_classes = output_dim[0] * output_dim[1]
    swin['norm_g'] = ones((num_features,))
    swin['norm_b'] = zeros((num_features,))
    swin['head_w'] = w_init((num_features, num_classes))
    swin['head_b'] = zeros((num_classes,))
    params['swin'] = swin
    return params


# ---------------------------------------------------------------------------
if __name__ == "__main__":
    B, T = 2, 8
    image_size = 16
    eeg_channels, frequency_bins = 4, 8
    output_dim = (5, 2)                    # num_classes = 10, final shape (B, 5, 2)

    key = jax.random.PRNGKey(0)
    k_eeg, k_vid = jax.random.split(key)
    eeg = jax.random.normal(k_eeg, (B, T, eeg_channels, frequency_bins), jnp.float32)
    video = jax.random.normal(k_vid, (B, T, 3, image_size, image_size), jnp.float32)

    params = build_params(42, image_size=image_size, eeg_channels=eeg_channels,
                          frequency_bins=frequency_bins, output_dim=output_dim, cfg=CFG)
    rel_index_full = compute_rel_position_index(CFG['window_size'])

    out = bridged_video_swin_forward(params, {'eeg': eeg, 'video': video},
                                     CFG, rel_index_full, image_size, output_dim)
    out = jax.block_until_ready(out)
    assert out.shape == (B,) + output_dim, out.shape
    assert bool(jnp.all(jnp.isfinite(out)))
    print("KERNEL_OK")
</pallas_src>

<mosaic_0001>
module attributes {stable_mosaic.version = 11 : i64} {
  func.func @_matmul_kernel(%arg0: i32, %arg1: i32, %arg2: i32, %arg3: memref<16x128xf32, #tpu.memory_space<vmem>>, %arg4: memref<128x128xbf16, #tpu.memory_space<vmem>>, %arg5: memref<1x128xf32, #tpu.memory_space<vmem>>, %arg6: memref<16x128xf32, #tpu.memory_space<vmem>>, %arg7: memref<16x128xf32, #tpu.memory_space<vmem>>) attributes {dimension_semantics = [#tpu.dimension_semantics<parallel>, #tpu.dimension_semantics<parallel>, #tpu.dimension_semantics<arbitrary>], iteration_bounds = array<i64: 1, 1, 1>, scalar_prefetch = 0 : i64, scratch_operands = 1 : i64, tpu.core_type = #tpu.core_type<tc>, window_params = [{transform_indices = @transform_0, window_bounds = array<i64: 16, 128>}, {transform_indices = @transform_1, window_bounds = array<i64: 128, 128>}, {transform_indices = @transform_2, window_bounds = array<i64: 1, 128>}, {transform_indices = @transform_3, window_bounds = array<i64: 16, 128>}]} {
    %c0_i32 = arith.constant 0 : i32
    %0 = arith.cmpi eq, %arg2, %c0_i32 : i32
    %1 = arith.extui %0 : i1 to i32
    %c0_i32_0 = arith.constant 0 : i32
    %2 = arith.cmpi ne, %1, %c0_i32_0 : i32
    scf.if %2 {
      %cst_10 = arith.constant 0.000000e+00 : f32
      %13 = vector.broadcast %cst_10 : f32 to vector<16x128xf32>
      %c0_11 = arith.constant 0 : index
      %c0_12 = arith.constant 0 : index
      %14 = vector.load %arg7[%c0_11, %c0_12] : memref<16x128xf32, #tpu.memory_space<vmem>>, vector<16x128xf32>
      tpu.vector_store %arg7[%c0_11, %c0_12], %13 {strides = array<i32>} : memref<16x128xf32, #tpu.memory_space<vmem>>, vector<16x128xf32>,
    } else {
    }
    %c0 = arith.constant 0 : index
    %c0_1 = arith.constant 0 : index
    %3 = vector.load %arg7[%c0, %c0_1] : memref<16x128xf32, #tpu.memory_space<vmem>>, vector<16x128xf32>
    %c0_2 = arith.constant 0 : index
    %c0_3 = arith.constant 0 : index
    %4 = vector.load %arg3[%c0_2, %c0_3] : memref<16x128xf32, #tpu.memory_space<vmem>>, vector<16x128xf32>
    %5 = arith.truncf %4 : vector<16x128xf32> to vector<16x128xbf16>
    %c0_4 = arith.constant 0 : index
    %c0_5 = arith.constant 0 : index
    %6 = vector.load %arg4[%c0_4, %c0_5] : memref<128x128xbf16, #tpu.memory_space<vmem>>, vector<128x128xbf16>
    %cst = arith.constant dense<0.000000e+00> : vector<16x128xf32>
    %7 = tpu.matmul %5, %6, %cst {dimension_numbers = #tpu.dot_dimension_numbers<[1], [0], [0], [1], [0, 0, 1, 1], [], []>} : vector<16x128xbf16>, vector<128x128xbf16>, vector<16x128xf32> -> vector<16x128xf32>
    %8 = arith.addf %3, %7 : vector<16x128xf32>
    %c0_6 = arith.constant 0 : index
    %c0_7 = arith.constant 0 : index
    %9 = vector.load %arg7[%c0_6, %c0_7] : memref<16x128xf32, #tpu.memory_space<vmem>>, vector<16x128xf32>
    tpu.vector_store %arg7[%c0_6, %c0_7], %8 {strides = array<i32>} : memref<16x128xf32, #tpu.memory_space<vmem>>, vector<16x128xf32>,
    %c0_i32_8 = arith.constant 0 : i32
    %10 = arith.cmpi eq, %arg2, %c0_i32_8 : i32
    %11 = arith.extui %10 : i1 to i32
    %c0_i32_9 = arith.constant 0 : i32
    %12 = arith.cmpi ne, %11, %c0_i32_9 : i32
    scf.if %12 {
      %c0_10 = arith.constant 0 : index
      %c0_11 = arith.constant 0 : index
      %13 = vector.load %arg7[%c0_10, %c0_11] : memref<16x128xf32, #tpu.memory_space<vmem>>, vector<16x128xf32>
      %c0_12 = arith.constant 0 : index
      %c0_13 = arith.constant 0 : index
      %14 = vector.load %arg5[%c0_12, %c0_13] : memref<1x128xf32, #tpu.memory_space<vmem>>, vector<1x128xf32>
      %15 = vector.broadcast %14 : vector<1x128xf32> to vector<16x128xf32>
      %16 = arith.addf %13, %15 : vector<16x128xf32>
      %c0_14 = arith.constant 0 : index
      %c0_15 = arith.constant 0 : index
      %17 = vector.load %arg6[%c0_14, %c0_15] : memref<16x128xf32, #tpu.memory_space<vmem>>, vector<16x128xf32>
      tpu.vector_store %arg6[%c0_14, %c0_15], %16 {strides = array<i32>} : memref<16x128xf32, #tpu.memory_space<vmem>>, vector<16x128xf32>,
    } else {
    }
    return
  }
  func.func @transform_0(%arg0: i32, %arg1: i32, %arg2: i32) -> (i32, i32) {
    %c0_i32 = arith.constant 0 : i32
    return %arg0, %arg2 : i32, i32
  }
  func.func @transform_1(%arg0: i32, %arg1: i32, %arg2: i32) -> (i32, i32) {
    %c0_i32 = arith.constant 0 : i32
    return %arg2, %arg1 : i32, i32
  }
  func.func @transform_2(%arg0: i32, %arg1: i32, %arg2: i32) -> (i32, i32) {
    %c0_i32 = arith.constant 0 : i32
    %c0_i32_0 = arith.constant 0 : i32
    return %c0_i32, %arg1 : i32, i32
  }
  func.func @transform_3(%arg0: i32, %arg1: i32, %arg2: i32) -> (i32, i32) {
    %c0_i32 = arith.constant 0 : i32
    return %arg0, %arg1 : i32, i32
  }
}

</mosaic_0001>

<llo_original>
// kernel: tpu_custom_call.1
$region0: #{tpu_custom_call.1}
  #allocation0 [shape = 'u32[]', space=smem, size = 0x4, offset = 0x4, fixed_abs, tag = 'smem constant byte address 0x4 - core index']
  #allocation1 [shape = 'u32[72,128]{1,0:T(1,128)}', space=vmem, size = 0x9000, scoped, tag = 'internal scratch']
  #allocation2 [shape = 'f32[16,128]{1,0:T(8,128)}', space=vmem, size = 0x2000, scoped, tag = 'scratch operand']
  %s0 = inlined_call_operand.hbm [shape: f32[16,128], index: 0, kind: input, shape index: {}]
  %s1 = inlined_call_operand.hbm [shape: bf16[128,128], index: 1, kind: input, shape index: {}]
  %s2 = inlined_call_operand.vmem [shape: f32[1,128], index: 2, kind: input, shape index: {}]
  %s3 = inlined_call_operand.hbm [shape: f32[16,128], index: 3, kind: output, shape index: {}]
  %s4 = sld [smem:[#allocation0]]
  $region38: #{tpu_custom_call.1} parent=0
    _
  %s6 = ssub.s32 1, %s4
  %s7 = scalar_select 0, %s6, %s4
  $region1: #{tpu_custom_call.1} parent=0
    #allocation3 [shape = 'u8[8192]{0}', space=vmem, size = 0x2000, scoped, tag = 'input window, operand 0, single buffered']
    #allocation4 [shape = 's32[1]{0}', space=sflag, size = 0x4, scoped, tag = 'scoped memory for tpu_custom_call.1']
    #allocation5 [shape = 's32[1]{0}', space=sflag, size = 0x4, scoped, tag = 'scoped memory for tpu_custom_call.1']
    #allocation6 [shape = 'u8[32768]{0}', space=vmem, size = 0x8000, scoped, tag = 'input window, operand 1, single buffered']
    #allocation7 [shape = 's32[1]{0}', space=sflag, size = 0x4, scoped, tag = 'scoped memory for tpu_custom_call.1']
    #allocation8 [shape = 'u8[8192]{0}', space=vmem, size = 0x2000, scoped, tag = 'output window, operand 0, single buffered']
    %8 = vsyncpa [#allocation4], 0
    %9 = vsyncpa [#allocation7], 0
    %10 = vsyncpa [#allocation5], 0
    // Predicated region
    $region2: #{tpu_custom_call.1} parent=1 // pred_check
      _
    $region3: #{tpu_custom_call.1} parent=1 // pred_check_branch
      %12 = sbr.rel (0) target = $region5
    $region4: #{tpu_custom_call.1} parent=1 // pred_region
      %14 = vsyncadd [#allocation4], 0
      %s15 = sshll.u32 %s0, 4
      %s16 = int_to_ptr.hbm [resolvable:$true] %s15
      %s17 = sshll.u32 [#allocation3], 4
      %s18 = int_to_ptr.vmem [resolvable:$true] %s17
      %23 = dma.hbm_to_vmem [thread:$0]  %s16, 256, %s18, [#allocation4], 128, 128, 8
    $region5: #{tpu_custom_call.1} parent=1 // pred_fallthru
      _
    // Predicated region
    $region6: #{tpu_custom_call.1} parent=1 // pred_check
      _
    $region7: #{tpu_custom_call.1} parent=1 // pred_check_branch
      %25 = sbr.rel (0) target = $region9
    $region8: #{tpu_custom_call.1} parent=1 // pred_region
      %27 = vsyncadd [#allocation7], 0
      %s28 = sshll.u32 %s1, 4
      %s29 = int_to_ptr.hbm [resolvable:$true] %s28
      %s30 = sshll.u32 [#allocation6], 4
      %s31 = int_to_ptr.vmem [resolvable:$true] %s30
      %36 = dma.hbm_to_vmem [thread:$0]  %s29, 1024, %s31, [#allocation7], 64, 64, 4
    $region9: #{tpu_custom_call.1} parent=1 // pred_fallthru
      _
    // Predicated region
    $region10: #{tpu_custom_call.1} parent=1 // pred_check
      _
    $region11: #{tpu_custom_call.1} parent=1 // pred_check_branch
      %38 = sbr.rel (0) target = $region13
    $region12: #{tpu_custom_call.1} parent=1 // pred_region
      _
    $region13: #{tpu_custom_call.1} parent=1 // pred_fallthru
      _
    // Predicated region
    $region14: #{tpu_custom_call.1} parent=1 // pred_check
      _
    $region15: #{tpu_custom_call.1} parent=1 // pred_check_branch
      %40 = sbr.rel (0) target = $region17
    $region16: #{tpu_custom_call.1} parent=1 // pred_region
      %42 = dma.done [#allocation4], 256
    $region17: #{tpu_custom_call.1} parent=1 // pred_fallthru
      _
    // Predicated region
    $region18: #{tpu_custom_call.1} parent=1 // pred_check
      _
    $region19: #{tpu_custom_call.1} parent=1 // pred_check_branch
      %44 = sbr.rel (0) target = $region21
    $region20: #{tpu_custom_call.1} parent=1 // pred_region
      %46 = dma.done [#allocation7], 1024
    $region21: #{tpu_custom_call.1} parent=1 // pred_fallthru
      _
    %p47 = scmp.eq.s32.totalorder 0, 0
    // Predicated region
    $region22: #{tpu_custom_call.1} parent=1 // pred_check
      %p48 = pneg %p47
    $region23: #{tpu_custom_call.1} parent=1 // pred_check_branch
      %50 = sbr.rel (%p48) target = $region25
    $region24: #{tpu_custom_call.1} parent=1 // pred_region
      %51 = vst [vmem:[#allocation2] sm:$0xff] 0.0
      %52 = vst [vmem:[#allocation2 + $0x8] sm:$0xff] 0.0
    $region25: #{tpu_custom_call.1} parent=1 // pred_fallthru
      _
    %v53 = vld [vmem:[#allocation2] sm:$0xff]
    %v54 = vld [vmem:[#allocation2 + $0x8] sm:$0xff]
    %v55 = vld [vmem:[#allocation3] sm:$0xff]
    %v56 = vld [vmem:[#allocation3 + $0x8] sm:$0xff]
    %v57 = vpack.c.bf16 %v56, %v55
    %v58 = vld [vmem:[#allocation6] sm:$0xf]
    %v59 = vld [vmem:[#allocation6 + $0x4] sm:$0xf]
    %v60 = vld [vmem:[#allocation6 + $0x8] sm:$0xf]
    %v61 = vld [vmem:[#allocation6 + $0xc] sm:$0xf]
    %v62 = vld [vmem:[#allocation6 + $0x10] sm:$0xf]
    %v63 = vld [vmem:[#allocation6 + $0x14] sm:$0xf]
    %v64 = vld [vmem:[#allocation6 + $0x18] sm:$0xf]
    %v65 = vld [vmem:[#allocation6 + $0x1c] sm:$0xf]
    %v66 = vld [vmem:[#allocation6 + $0x20] sm:$0xf]
    %v67 = vld [vmem:[#allocation6 + $0x24] sm:$0xf]
    %v68 = vld [vmem:[#allocation6 + $0x28] sm:$0xf]
    %v69 = vld [vmem:[#allocation6 + $0x2c] sm:$0xf]
    %v70 = vld [vmem:[#allocation6 + $0x30] sm:$0xf]
    %v71 = vld [vmem:[#allocation6 + $0x34] sm:$0xf]
    %v72 = vld [vmem:[#allocation6 + $0x38] sm:$0xf]
    %v73 = vld [vmem:[#allocation6 + $0x3c] sm:$0xf]
    %v90 = vunpack.c.l.b16 %v58
    %v91 = vunpack.c.l.b16 %v59
    %v92 = vunpack.c.l.b16 %v60
    %v93 = vunpack.c.l.b16 %v61
    %v94 = vunpack.c.l.b16 %v62
    %v95 = vunpack.c.l.b16 %v63
    %v96 = vunpack.c.l.b16 %v64
    %v97 = vunpack.c.l.b16 %v65
    %v98 = vunpack.c.l.b16 %v66
    %v99 = vunpack.c.l.b16 %v67
    %v100 = vunpack.c.l.b16 %v68
    %v101 = vunpack.c.l.b16 %v69
    %v102 = vunpack.c.l.b16 %v70
    %v103 = vunpack.c.l.b16 %v71
    %v104 = vunpack.c.l.b16 %v72
    %v105 = vunpack.c.l.b16 %v73
    %v106 = vpack.c.b16 %v91, %v90
    %v107 = vpack.c.b16 %v93, %v92
    %v108 = vpack.c.b16 %v95, %v94
    %v109 = vpack.c.b16 %v97, %v96
    %v110 = vpack.c.b16 %v99, %v98
    %v111 = vpack.c.b16 %v101, %v100
    %v112 = vpack.c.b16 %v103, %v102
    %v113 = vpack.c.b16 %v105, %v104
    %122 = vmatpush.bf16.msra.mxu0 %v113
    %123 = vmatpush.bf16.msra.mxu0 %v112
    %124 = vmatpush.bf16.msra.mxu0 %v111
    %125 = vmatpush.bf16.msra.mxu0 %v110
    %126 = vmatpush.bf16.msra.mxu0 %v109
    %127 = vmatpush.bf16.msra.mxu0 %v108
    %128 = vmatpush.bf16.msra.mxu0 %v107
    %129 = vmatpush.bf16.msra.mxu0 %v106
    %130 = vmatmul.bf16.gmra.mxu0 %v57
    %v131 = vpop.f32.mrf.mxu0
    %v132 = vadd.f32 0.0, %v131
    %v133 = vpop.f32.mrf.mxu0
    %v134 = vadd.f32 0.0, %v133
    %135 = vdwg.mxu0
    %v136 = vadd.f32 %v53, %v132
    %v137 = vadd.f32 %v54, %v134
    %138 = vst [vmem:[#allocation2] sm:$0xff] %v136
    %139 = vst [vmem:[#allocation2 + $0x8] sm:$0xff] %v137
    // Predicated region
    $region26: #{tpu_custom_call.1} parent=1 // pred_check
      %p140 = pneg %p47
    $region27: #{tpu_custom_call.1} parent=1 // pred_check_branch
      %142 = sbr.rel (%p140) target = $region29
    $region28: #{tpu_custom_call.1} parent=1 // pred_region
      %v143 = vld [vmem:[#allocation2] sm:$0xff]
      %v144 = vld [vmem:[#allocation2 + $0x8] sm:$0xff]
      %v145 = vld [vmem:[%s2] sm:$0x1]
      %v147 = vperm.slane %v145, 0
      %v149 = vadd.f32 %v143, %v147
      %v150 = vadd.f32 %v144, %v147
      %151 = vst [vmem:[#allocation8] sm:$0xff] %v149
      %152 = vst [vmem:[#allocation8 + $0x8] sm:$0xff] %v150
    $region29: #{tpu_custom_call.1} parent=1 // pred_fallthru
      _
    // Predicated region
    $region30: #{tpu_custom_call.1} parent=1 // pred_check
      _
    $region31: #{tpu_custom_call.1} parent=1 // pred_check_branch
      %154 = sbr.rel (0) target = $region33
    $region32: #{tpu_custom_call.1} parent=1 // pred_region
      %156 = vsyncadd [#allocation5], 0
      %s157 = sshll.u32 [#allocation8], 4
      %s158 = int_to_ptr.vmem [resolvable:$true] %s157
      %s159 = sshll.u32 %s3, 4
      %s160 = int_to_ptr.hbm [resolvable:$true] %s159
      %165 = dma.vmem_to_hbm [thread:$0]  %s158, 256, %s160, [#allocation5], 128, 128, 8
    $region33: #{tpu_custom_call.1} parent=1 // pred_fallthru
      _
    // Predicated region
    $region34: #{tpu_custom_call.1} parent=1 // pred_check
      _
    $region35: #{tpu_custom_call.1} parent=1 // pred_check_branch
      %167 = sbr.rel (0) target = $region37
    $region36: #{tpu_custom_call.1} parent=1 // pred_region
      %169 = dma.done [#allocation5], 256
    $region37: #{tpu_custom_call.1} parent=1 // pred_fallthru
      _
    %170 = vsyncpa [#allocation4], 1
    %171 = vsyncpa [#allocation7], 1
    %172 = vsyncpa [#allocation5], 1

</llo_original>
